<compile_context>
chip_gen: v7x
topology: tpu7x:2x2x1
jax: 0.10.0
libtpu: 0.0.40
codegen_flags: <defaults>
</compile_context>

<pallas_src>
import jax
import jax.numpy as jnp
from jax import lax
from jax.experimental import pallas as pl
from jax.experimental.pallas import tpu as pltpu


_SLAB_ROWS = 8  # output rows processed per inner (unrolled) step


def _repvggdw_kernel(params_ref, x_ref, o_ref):
    # params_ref: VMEM (11, TC) f32 : rows 0..8 fused 3x3 taps (kh*3+kw),
    #                                 row 9 fused 1x1 tap (+1 identity folded),
    #                                 row 10 total bias.
    # x_ref:      VMEM (1, H, W, TC) input block (channels-last)
    # o_ref:      VMEM (1, H, W, TC) output block
    H = x_ref.shape[1]
    W = x_ref.shape[2]
    TC = x_ref.shape[3]
    f32 = jnp.float32

    # Hoisted per-channel fused parameters (lane = channel); broadcast against
    # slab-shaped values inside the tap loop below.
    def prow(k):
        return params_ref[k:k + 1, :].astype(f32).reshape(1, 1, TC)

    w3 = [prow(k) for k in range(9)]
    w1b = prow(9)
    bias = prow(10)

    R = min(_SLAB_ROWS, H)
    for r0 in range(0, H, R):
        r1 = min(r0 + R, H)
        rout = r1 - r0

        # Load input rows r0-1 .. r1 (clipped) and substitute zero rows at the
        # image borders -> xin row i corresponds to input row (r0 - 1 + i).
        in_lo = max(r0 - 1, 0)
        in_hi = min(r1 + 1, H)
        xin = x_ref[0, in_lo:in_hi, :, :].astype(f32)           # (rows, W, TC)
        zrow = jnp.zeros((1, W, TC), f32)
        if r0 == 0:
            xin = jnp.concatenate([zrow, xin], axis=0)
        if r1 == H:
            xin = jnp.concatenate([xin, zrow], axis=0)          # (rout+2, W, TC)

        # W-shifted copies (zero fill at the borders), computed once per input
        # row slab and reused by all three kh taps (line-buffer reuse).
        zcol = jnp.zeros((rout + 2, 1, TC), f32)
        x_m = xin                                                # x[., w  ]  kw=1
        x_l = jnp.concatenate([xin[:, 1:, :], zcol], axis=1)     # x[., w+1]  kw=2
        x_r = jnp.concatenate([zcol, xin[:, :-1, :]], axis=1)    # x[., w-1]  kw=0
        xs = (x_r, x_m, x_l)

        # identity + fused (1x1 dwconv + BN) branch + total bias.
        acc = xin[1:1 + rout] * w1b + bias

        # fused (3x3 dwconv + BN) branch: 9 multiply-adds on row bands of the
        # pre-shifted slabs (dh = kh-1 is a row offset, dw = kw-1 the W shift).
        for kh in range(3):
            for kw in range(3):
                acc = acc + w3[kh * 3 + kw] * xs[kw][kh:kh + rout]

        o_ref[0, r0:r1, :, :] = acc.astype(o_ref.dtype)


def _vmem_capacity_bytes():
    """Physical VMEM of the local part (128 MiB v5e/v6e, 64 MiB per-TC v7x)."""
    try:
        cap = int(getattr(pltpu.get_tpu_info(), "vmem_capacity_bytes", 0))
        if cap > 0:
            return cap
    except Exception:
        pass
    return 64 * 1024 * 1024   # conservative (v7x-sized) fallback


def _block_vmem_bytes(tc, H, W, itemsize):
    """Estimated VMEM per grid step: double-buffered in + out blocks, params,
    plus slack for slab intermediates / compiler scratch."""
    blk = H * W * tc * itemsize
    return 4 * blk + 4 * 11 * tc * 4 + (2 << 20)


def _pick_channel_block(N, C, H, W, itemsize, budget):
    """Largest legal channel block fitting the budget; prefers >= 2 grid steps
    (so both v7x TensorCores get work and the input DMA can pipeline)."""
    cands = sorted({c for c in range(128, C + 1, 128) if C % c == 0} | {C},
                   reverse=True)
    fitting = [tc for tc in cands if _block_vmem_bytes(tc, H, W, itemsize) <= budget]
    if not fitting:
        fitting = [cands[-1]]      # smallest legal block; vmem limit raised below
    multi = [tc for tc in fitting if N * (C // tc) >= 2]
    return (multi or fitting)[0]


def repvggdw_forward_nhwc(x, params):
    """x: (N, H, W, C) channels-last; params: (11, C) f32 fused weights/bias."""
    N, H, W, C = x.shape
    itemsize = jnp.dtype(x.dtype).itemsize
    cap = _vmem_capacity_bytes()
    budget = (3 * cap) // 8        # ~48 MiB on 128 MiB parts, ~24 MiB on v7x
    tc = _pick_channel_block(N, C, H, W, itemsize, budget)
    need = _block_vmem_bytes(tc, H, W, itemsize)
    vmem_limit = min(cap, max(need + (4 << 20), 32 * 1024 * 1024))
    grid = (N, C // tc)

    grid_spec = pltpu.PrefetchScalarGridSpec(
        num_scalar_prefetch=0,
        grid=grid,
        in_specs=[
            pl.BlockSpec((11, tc), lambda n, c: (0, c)),
            pl.BlockSpec((1, H, W, tc), lambda n, c: (n, 0, 0, c)),
        ],
        out_specs=pl.BlockSpec((1, H, W, tc), lambda n, c: (n, 0, 0, c)),
    )

    return pl.pallas_call(
        _repvggdw_kernel,
        out_shape=jax.ShapeDtypeStruct((N, H, W, C), x.dtype),
        grid_spec=grid_spec,
        compiler_params=pltpu.CompilerParams(
            dimension_semantics=("parallel", "parallel"),
            vmem_limit_bytes=vmem_limit),
    )(params, x)


@jax.jit
def repvggdw_forward(x_nchw, params):
    """NCHW wrapper matching the PyTorch module layout.

    The kernel is channels-last (lane-dense).  In a real network keep
    activations NHWC end-to-end and call repvggdw_forward_nhwc directly to
    avoid these two boundary transposes (each is a full HBM pass).
    """
    x = jnp.transpose(x_nchw, (0, 2, 3, 1))
    y = repvggdw_forward_nhwc(x, params)
    return jnp.transpose(y, (0, 3, 1, 2))


def _fuse_bn_params(w3, g3, b3, m3, v3, w1, g1, b1, m1, v1, eps=1e-5):
    """Fold eval-mode BN of both branches + the identity into (11, C) params."""
    C = w3.shape[0]
    s3 = g3 / jnp.sqrt(v3 + eps)
    s1 = g1 / jnp.sqrt(v1 + eps)
    w3f = (w3[:, 0] * s3[:, None, None]).reshape(C, 9).T     # (9, C), row = kh*3+kw
    w1f = w1[:, 0, 0, 0] * s1 + 1.0                          # (C,)  +1 = identity
    bias = (b3 - m3 * s3) + (b1 - m1 * s1)                   # (C,)
    return jnp.concatenate(
        [w3f, w1f[None, :], bias[None, :]], axis=0).astype(jnp.float32)


def _reference_forward(x, w3, g3, b3, m3, v3, w1, g1, b1, m1, v1, eps=1e-5):
    """Pure-JAX reference: depthwise conv + BN (eval) for both branches + identity."""
    C = x.shape[1]

    def bn(y, g, b, m, v):
        inv = g / jnp.sqrt(v + eps)
        return y * inv[None, :, None, None] + (b - m * inv)[None, :, None, None]

    y3 = lax.conv_general_dilated(
        x, w3, window_strides=(1, 1), padding=((1, 1), (1, 1)),
        dimension_numbers=("NCHW", "OIHW", "NCHW"), feature_group_count=C)
    y1 = lax.conv_general_dilated(
        x, w1, window_strides=(1, 1), padding=((0, 0), (0, 0)),
        dimension_numbers=("NCHW", "OIHW", "NCHW"), feature_group_count=C)
    return bn(y3, g3, b3, m3, v3) + bn(y1, g1, b1, m1, v1) + x


if __name__ == "__main__":
    N, C, H, W = 2, 4, 16, 16   # ed = C = 4
    key = jax.random.PRNGKey(0)
    kx, k3, k1, km3, kv3, km1, kv1 = jax.random.split(key, 7)

    x = jax.random.normal(kx, (N, C, H, W), dtype=jnp.float32)

    # Depthwise conv weights (groups = ed -> (ed, 1, k, k)); no conv bias.
    w3 = jax.random.normal(k3, (C, 1, 3, 3), dtype=jnp.float32) * 0.1
    w1 = jax.random.normal(k1, (C, 1, 1, 1), dtype=jnp.float32) * 0.1

    # BatchNorm params per Conv2d_BN.__init__: weight=1, bias=0; running stats
    # non-trivial but deterministic (eval-mode semantics).
    g3 = jnp.ones((C,), jnp.float32)
    b3 = jnp.zeros((C,), jnp.float32)
    m3 = 0.05 * jax.random.normal(km3, (C,), dtype=jnp.float32)
    v3 = 1.0 + 0.1 * jax.nn.softplus(jax.random.normal(kv3, (C,), dtype=jnp.float32))
    g1 = jnp.ones((C,), jnp.float32)
    b1 = jnp.zeros((C,), jnp.float32)
    m1 = 0.05 * jax.random.normal(km1, (C,), dtype=jnp.float32)
    v1 = 1.0 + 0.1 * jax.nn.softplus(jax.random.normal(kv1, (C,), dtype=jnp.float32))

    params = _fuse_bn_params(w3, g3, b3, m3, v3, w1, g1, b1, m1, v1)

    out = repvggdw_forward(x, params)
    out = jax.block_until_ready(out)

    ref = _reference_forward(x, w3, g3, b3, m3, v3, w1, g1, b1, m1, v1)
    assert out.shape == (N, C, H, W) and out.dtype == x.dtype
    assert jnp.allclose(out, ref, atol=1e-4, rtol=1e-4), "mismatch vs JAX reference"

    print("KERNEL_OK")
</pallas_src>

<mosaic_0001>
module attributes {stable_mosaic.version = 11 : i64} {
  func.func @_repvggdw_kernel(%arg0: i32, %arg1: i32, %arg2: memref<11x4xf32, #tpu.memory_space<vmem>>, %arg3: memref<1x16x16x4xf32, #tpu.memory_space<vmem>>, %arg4: memref<1x16x16x4xf32, #tpu.memory_space<vmem>>) attributes {dimension_semantics = [#tpu.dimension_semantics<parallel>, #tpu.dimension_semantics<parallel>], iteration_bounds = array<i64: 2, 1>, scalar_prefetch = 0 : i64, scratch_operands = 0 : i64, tpu.core_type = #tpu.core_type<tc>, window_params = [{transform_indices = @transform_0, window_bounds = array<i64: 11, 4>}, {transform_indices = @transform_1, window_bounds = array<i64: 1, 16, 16, 4>}, {transform_indices = @transform_2, window_bounds = array<i64: 1, 16, 16, 4>}]} {
    %c0 = arith.constant 0 : index
    %c0_0 = arith.constant 0 : index
    %0 = vector.load %arg2[%c0, %c0_0] : memref<11x4xf32, #tpu.memory_space<vmem>>, vector<1x4xf32>
    %1 = vector.shape_cast %0 : vector<1x4xf32> to vector<1x1x4xf32>
    %c1 = arith.constant 1 : index
    %c0_1 = arith.constant 0 : index
    %2 = vector.load %arg2[%c1, %c0_1] : memref<11x4xf32, #tpu.memory_space<vmem>>, vector<1x4xf32>
    %3 = vector.shape_cast %2 : vector<1x4xf32> to vector<1x1x4xf32>
    %c2 = arith.constant 2 : index
    %c0_2 = arith.constant 0 : index
    %4 = vector.load %arg2[%c2, %c0_2] : memref<11x4xf32, #tpu.memory_space<vmem>>, vector<1x4xf32>
    %5 = vector.shape_cast %4 : vector<1x4xf32> to vector<1x1x4xf32>
    %c3 = arith.constant 3 : index
    %c0_3 = arith.constant 0 : index
    %6 = vector.load %arg2[%c3, %c0_3] : memref<11x4xf32, #tpu.memory_space<vmem>>, vector<1x4xf32>
    %7 = vector.shape_cast %6 : vector<1x4xf32> to vector<1x1x4xf32>
    %c4 = arith.constant 4 : index
    %c0_4 = arith.constant 0 : index
    %8 = vector.load %arg2[%c4, %c0_4] : memref<11x4xf32, #tpu.memory_space<vmem>>, vector<1x4xf32>
    %9 = vector.shape_cast %8 : vector<1x4xf32> to vector<1x1x4xf32>
    %c5 = arith.constant 5 : index
    %c0_5 = arith.constant 0 : index
    %10 = vector.load %arg2[%c5, %c0_5] : memref<11x4xf32, #tpu.memory_space<vmem>>, vector<1x4xf32>
    %11 = vector.shape_cast %10 : vector<1x4xf32> to vector<1x1x4xf32>
    %c6 = arith.constant 6 : index
    %c0_6 = arith.constant 0 : index
    %12 = vector.load %arg2[%c6, %c0_6] : memref<11x4xf32, #tpu.memory_space<vmem>>, vector<1x4xf32>
    %13 = vector.shape_cast %12 : vector<1x4xf32> to vector<1x1x4xf32>
    %c7 = arith.constant 7 : index
    %c0_7 = arith.constant 0 : index
    %14 = vector.load %arg2[%c7, %c0_7] : memref<11x4xf32, #tpu.memory_space<vmem>>, vector<1x4xf32>
    %15 = vector.shape_cast %14 : vector<1x4xf32> to vector<1x1x4xf32>
    %c8 = arith.constant 8 : index
    %c0_8 = arith.constant 0 : index
    %16 = vector.load %arg2[%c8, %c0_8] : memref<11x4xf32, #tpu.memory_space<vmem>>, vector<1x4xf32>
    %17 = vector.shape_cast %16 : vector<1x4xf32> to vector<1x1x4xf32>
    %c9 = arith.constant 9 : index
    %c0_9 = arith.constant 0 : index
    %18 = vector.load %arg2[%c9, %c0_9] : memref<11x4xf32, #tpu.memory_space<vmem>>, vector<1x4xf32>
    %19 = vector.shape_cast %18 : vector<1x4xf32> to vector<1x1x4xf32>
    %c10 = arith.constant 10 : index
    %c0_10 = arith.constant 0 : index
    %20 = vector.load %arg2[%c10, %c0_10] : memref<11x4xf32, #tpu.memory_space<vmem>>, vector<1x4xf32>
    %21 = vector.shape_cast %20 : vector<1x4xf32> to vector<1x1x4xf32>
    %c0_11 = arith.constant 0 : index
    %c0_12 = arith.constant 0 : index
    %c0_13 = arith.constant 0 : index
    %c0_14 = arith.constant 0 : index
    %22 = vector.load %arg3[%c0_11, %c0_12, %c0_13, %c0_14] : memref<1x16x16x4xf32, #tpu.memory_space<vmem>>, vector<1x9x16x4xf32>
    %23 = vector.shape_cast %22 : vector<1x9x16x4xf32> to vector<9x16x4xf32>
    %cst = arith.constant 0.000000e+00 : f32
    %24 = vector.broadcast %cst : f32 to vector<1x16x4xf32>
    %25 = tpu.concatenate %24, %23 in 0 : vector<1x16x4xf32>, vector<9x16x4xf32> -> vector<10x16x4xf32>
    %cst_15 = arith.constant 0.000000e+00 : f32
    %26 = vector.broadcast %cst_15 : f32 to vector<10x1x4xf32>
    %27 = vector.extract_strided_slice %25 {offsets = [0, 1, 0], sizes = [10, 15, 4], strides = [1, 1, 1]} : vector<10x16x4xf32> to vector<10x15x4xf32>
    %28 = tpu.concatenate %27, %26 in 1 : vector<10x15x4xf32>, vector<10x1x4xf32> -> vector<10x16x4xf32>
    %29 = vector.extract_strided_slice %25 {offsets = [0, 0, 0], sizes = [10, 15, 4], strides = [1, 1, 1]} : vector<10x16x4xf32> to vector<10x15x4xf32>
    %30 = tpu.concatenate %26, %29 in 1 : vector<10x1x4xf32>, vector<10x15x4xf32> -> vector<10x16x4xf32>
    %31 = vector.extract_strided_slice %25 {offsets = [1, 0, 0], sizes = [8, 16, 4], strides = [1, 1, 1]} : vector<10x16x4xf32> to vector<8x16x4xf32>
    %32 = vector.broadcast %19 : vector<1x1x4xf32> to vector<8x16x4xf32>
    %33 = arith.mulf %31, %32 : vector<8x16x4xf32>
    %34 = vector.broadcast %21 : vector<1x1x4xf32> to vector<8x16x4xf32>
    %35 = arith.addf %33, %34 : vector<8x16x4xf32>
    %36 = vector.extract_strided_slice %30 {offsets = [0, 0, 0], sizes = [8, 16, 4], strides = [1, 1, 1]} : vector<10x16x4xf32> to vector<8x16x4xf32>
    %37 = vector.broadcast %1 : vector<1x1x4xf32> to vector<8x16x4xf32>
    %38 = arith.mulf %37, %36 : vector<8x16x4xf32>
    %39 = arith.addf %35, %38 : vector<8x16x4xf32>
    %40 = vector.extract_strided_slice %25 {offsets = [0, 0, 0], sizes = [8, 16, 4], strides = [1, 1, 1]} : vector<10x16x4xf32> to vector<8x16x4xf32>
    %41 = vector.broadcast %3 : vector<1x1x4xf32> to vector<8x16x4xf32>
    %42 = arith.mulf %41, %40 : vector<8x16x4xf32>
    %43 = arith.addf %39, %42 : vector<8x16x4xf32>
    %44 = vector.extract_strided_slice %28 {offsets = [0, 0, 0], sizes = [8, 16, 4], strides = [1, 1, 1]} : vector<10x16x4xf32> to vector<8x16x4xf32>
    %45 = vector.broadcast %5 : vector<1x1x4xf32> to vector<8x16x4xf32>
    %46 = arith.mulf %45, %44 : vector<8x16x4xf32>
    %47 = arith.addf %43, %46 : vector<8x16x4xf32>
    %48 = vector.extract_strided_slice %30 {offsets = [1, 0, 0], sizes = [8, 16, 4], strides = [1, 1, 1]} : vector<10x16x4xf32> to vector<8x16x4xf32>
    %49 = vector.broadcast %7 : vector<1x1x4xf32> to vector<8x16x4xf32>
    %50 = arith.mulf %49, %48 : vector<8x16x4xf32>
    %51 = arith.addf %47, %50 : vector<8x16x4xf32>
    %52 = vector.extract_strided_slice %25 {offsets = [1, 0, 0], sizes = [8, 16, 4], strides = [1, 1, 1]} : vector<10x16x4xf32> to vector<8x16x4xf32>
    %53 = vector.broadcast %9 : vector<1x1x4xf32> to vector<8x16x4xf32>
    %54 = arith.mulf %53, %52 : vector<8x16x4xf32>
    %55 = arith.addf %51, %54 : vector<8x16x4xf32>
    %56 = vector.extract_strided_slice %28 {offsets = [1, 0, 0], sizes = [8, 16, 4], strides = [1, 1, 1]} : vector<10x16x4xf32> to vector<8x16x4xf32>
    %57 = vector.broadcast %11 : vector<1x1x4xf32> to vector<8x16x4xf32>
    %58 = arith.mulf %57, %56 : vector<8x16x4xf32>
    %59 = arith.addf %55, %58 : vector<8x16x4xf32>
    %60 = vector.extract_strided_slice %30 {offsets = [2, 0, 0], sizes = [8, 16, 4], strides = [1, 1, 1]} : vector<10x16x4xf32> to vector<8x16x4xf32>
    %61 = vector.broadcast %13 : vector<1x1x4xf32> to vector<8x16x4xf32>
    %62 = arith.mulf %61, %60 : vector<8x16x4xf32>
    %63 = arith.addf %59, %62 : vector<8x16x4xf32>
    %64 = vector.extract_strided_slice %25 {offsets = [2, 0, 0], sizes = [8, 16, 4], strides = [1, 1, 1]} : vector<10x16x4xf32> to vector<8x16x4xf32>
    %65 = vector.broadcast %15 : vector<1x1x4xf32> to vector<8x16x4xf32>
    %66 = arith.mulf %65, %64 : vector<8x16x4xf32>
    %67 = arith.addf %63, %66 : vector<8x16x4xf32>
    %68 = vector.extract_strided_slice %28 {offsets = [2, 0, 0], sizes = [8, 16, 4], strides = [1, 1, 1]} : vector<10x16x4xf32> to vector<8x16x4xf32>
    %69 = vector.broadcast %17 : vector<1x1x4xf32> to vector<8x16x4xf32>
    %70 = arith.mulf %69, %68 : vector<8x16x4xf32>
    %71 = arith.addf %67, %70 : vector<8x16x4xf32>
    %c0_16 = arith.constant 0 : index
    %c0_17 = arith.constant 0 : index
    %c0_18 = arith.constant 0 : index
    %c0_19 = arith.constant 0 : index
    %72 = vector.load %arg4[%c0_16, %c0_17, %c0_18, %c0_19] : memref<1x16x16x4xf32, #tpu.memory_space<vmem>>, vector<1x8x16x4xf32>
    %73 = vector.shape_cast %72 : vector<1x8x16x4xf32> to vector<8x16x4xf32>
    %74 = vector.shape_cast %71 : vector<8x16x4xf32> to vector<1x8x16x4xf32>
    tpu.vector_store %arg4[%c0_16, %c0_17, %c0_18, %c0_19], %74 {strides = array<i32>} : memref<1x16x16x4xf32, #tpu.memory_space<vmem>>, vector<1x8x16x4xf32>,
    %c0_20 = arith.constant 0 : index
    %c7_21 = arith.constant 7 : index
    %c0_22 = arith.constant 0 : index
    %c0_23 = arith.constant 0 : index
    %75 = vector.load %arg3[%c0_20, %c7_21, %c0_22, %c0_23] : memref<1x16x16x4xf32, #tpu.memory_space<vmem>>, vector<1x9x16x4xf32>
    %76 = vector.shape_cast %75 : vector<1x9x16x4xf32> to vector<9x16x4xf32>
    %cst_24 = arith.constant 0.000000e+00 : f32
    %77 = vector.broadcast %cst_24 : f32 to vector<1x16x4xf32>
    %78 = tpu.concatenate %76, %77 in 0 : vector<9x16x4xf32>, vector<1x16x4xf32> -> vector<10x16x4xf32>
    %cst_25 = arith.constant 0.000000e+00 : f32
    %79 = vector.broadcast %cst_25 : f32 to vector<10x1x4xf32>
    %80 = vector.extract_strided_slice %78 {offsets = [0, 1, 0], sizes = [10, 15, 4], strides = [1, 1, 1]} : vector<10x16x4xf32> to vector<10x15x4xf32>
    %81 = tpu.concatenate %80, %79 in 1 : vector<10x15x4xf32>, vector<10x1x4xf32> -> vector<10x16x4xf32>
    %82 = vector.extract_strided_slice %78 {offsets = [0, 0, 0], sizes = [10, 15, 4], strides = [1, 1, 1]} : vector<10x16x4xf32> to vector<10x15x4xf32>
    %83 = tpu.concatenate %79, %82 in 1 : vector<10x1x4xf32>, vector<10x15x4xf32> -> vector<10x16x4xf32>
    %84 = vector.extract_strided_slice %78 {offsets = [1, 0, 0], sizes = [8, 16, 4], strides = [1, 1, 1]} : vector<10x16x4xf32> to vector<8x16x4xf32>
    %85 = vector.broadcast %19 : vector<1x1x4xf32> to vector<8x16x4xf32>
    %86 = arith.mulf %84, %85 : vector<8x16x4xf32>
    %87 = vector.broadcast %21 : vector<1x1x4xf32> to vector<8x16x4xf32>
    %88 = arith.addf %86, %87 : vector<8x16x4xf32>
    %89 = vector.extract_strided_slice %83 {offsets = [0, 0, 0], sizes = [8, 16, 4], strides = [1, 1, 1]} : vector<10x16x4xf32> to vector<8x16x4xf32>
    %90 = vector.broadcast %1 : vector<1x1x4xf32> to vector<8x16x4xf32>
    %91 = arith.mulf %90, %89 : vector<8x16x4xf32>
    %92 = arith.addf %88, %91 : vector<8x16x4xf32>
    %93 = vector.extract_strided_slice %78 {offsets = [0, 0, 0], sizes = [8, 16, 4], strides = [1, 1, 1]} : vector<10x16x4xf32> to vector<8x16x4xf32>
    %94 = vector.broadcast %3 : vector<1x1x4xf32> to vector<8x16x4xf32>
    %95 = arith.mulf %94, %93 : vector<8x16x4xf32>
    %96 = arith.addf %92, %95 : vector<8x16x4xf32>
    %97 = vector.extract_strided_slice %81 {offsets = [0, 0, 0], sizes = [8, 16, 4], strides = [1, 1, 1]} : vector<10x16x4xf32> to vector<8x16x4xf32>
    %98 = vector.broadcast %5 : vector<1x1x4xf32> to vector<8x16x4xf32>
    %99 = arith.mulf %98, %97 : vector<8x16x4xf32>
    %100 = arith.addf %96, %99 : vector<8x16x4xf32>
    %101 = vector.extract_strided_slice %83 {offsets = [1, 0, 0], sizes = [8, 16, 4], strides = [1, 1, 1]} : vector<10x16x4xf32> to vector<8x16x4xf32>
    %102 = vector.broadcast %7 : vector<1x1x4xf32> to vector<8x16x4xf32>
    %103 = arith.mulf %102, %101 : vector<8x16x4xf32>
    %104 = arith.addf %100, %103 : vector<8x16x4xf32>
    %105 = vector.extract_strided_slice %78 {offsets = [1, 0, 0], sizes = [8, 16, 4], strides = [1, 1, 1]} : vector<10x16x4xf32> to vector<8x16x4xf32>
    %106 = vector.broadcast %9 : vector<1x1x4xf32> to vector<8x16x4xf32>
    %107 = arith.mulf %106, %105 : vector<8x16x4xf32>
    %108 = arith.addf %104, %107 : vector<8x16x4xf32>
    %109 = vector.extract_strided_slice %81 {offsets = [1, 0, 0], sizes = [8, 16, 4], strides = [1, 1, 1]} : vector<10x16x4xf32> to vector<8x16x4xf32>
    %110 = vector.broadcast %11 : vector<1x1x4xf32> to vector<8x16x4xf32>
    %111 = arith.mulf %110, %109 : vector<8x16x4xf32>
    %112 = arith.addf %108, %111 : vector<8x16x4xf32>
    %113 = vector.extract_strided_slice %83 {offsets = [2, 0, 0], sizes = [8, 16, 4], strides = [1, 1, 1]} : vector<10x16x4xf32> to vector<8x16x4xf32>
    %114 = vector.broadcast %13 : vector<1x1x4xf32> to vector<8x16x4xf32>
    %115 = arith.mulf %114, %113 : vector<8x16x4xf32>
    %116 = arith.addf %112, %115 : vector<8x16x4xf32>
    %117 = vector.extract_strided_slice %78 {offsets = [2, 0, 0], sizes = [8, 16, 4], strides = [1, 1, 1]} : vector<10x16x4xf32> to vector<8x16x4xf32>
    %118 = vector.broadcast %15 : vector<1x1x4xf32> to vector<8x16x4xf32>
    %119 = arith.mulf %118, %117 : vector<8x16x4xf32>
    %120 = arith.addf %116, %119 : vector<8x16x4xf32>
    %121 = vector.extract_strided_slice %81 {offsets = [2, 0, 0], sizes = [8, 16, 4], strides = [1, 1, 1]} : vector<10x16x4xf32> to vector<8x16x4xf32>
    %122 = vector.broadcast %17 : vector<1x1x4xf32> to vector<8x16x4xf32>
    %123 = arith.mulf %122, %121 : vector<8x16x4xf32>
    %124 = arith.addf %120, %123 : vector<8x16x4xf32>
    %c0_26 = arith.constant 0 : index
    %c8_27 = arith.constant 8 : index
    %c0_28 = arith.constant 0 : index
    %c0_29 = arith.constant 0 : index
    %125 = vector.load %arg4[%c0_26, %c8_27, %c0_28, %c0_29] : memref<1x16x16x4xf32, #tpu.memory_space<vmem>>, vector<1x8x16x4xf32>
    %126 = vector.shape_cast %125 : vector<1x8x16x4xf32> to vector<8x16x4xf32>
    %127 = vector.shape_cast %124 : vector<8x16x4xf32> to vector<1x8x16x4xf32>
    tpu.vector_store %arg4[%c0_26, %c8_27, %c0_28, %c0_29], %127 {strides = array<i32>} : memref<1x16x16x4xf32, #tpu.memory_space<vmem>>, vector<1x8x16x4xf32>,
    return
  }
  func.func @transform_0(%arg0: i32, %arg1: i32) -> (i32, i32) {
    %c0_i32 = arith.constant 0 : i32
    %c0_i32_0 = arith.constant 0 : i32
    return %c0_i32, %arg1 : i32, i32
  }
  func.func @transform_1(%arg0: i32, %arg1: i32) -> (i32, i32, i32, i32) {
    %c0_i32 = arith.constant 0 : i32
    %c0_i32_0 = arith.constant 0 : i32
    %c0_i32_1 = arith.constant 0 : i32
    return %arg0, %c0_i32, %c0_i32_0, %arg1 : i32, i32, i32, i32
  }
  func.func @transform_2(%arg0: i32, %arg1: i32) -> (i32, i32, i32, i32) {
    %c0_i32 = arith.constant 0 : i32
    %c0_i32_0 = arith.constant 0 : i32
    %c0_i32_1 = arith.constant 0 : i32
    return %arg0, %c0_i32, %c0_i32_0, %arg1 : i32, i32, i32, i32
  }
}

</mosaic_0001>

<llo_original>
// kernel: repvggdw_forward.1
$region0: #{repvggdw_forward.1}
  #allocation0 [shape = 'u32[]', space=smem, size = 0x4, offset = 0x4, fixed_abs, tag = 'smem constant byte address 0x4 - core index']
  #allocation1 [shape = 'u32[144,128]{1,0:T(1,128)}', space=vmem, size = 0x12000, scoped, tag = 'internal scratch']
  %s0 = inlined_call_operand.vmem [shape: f32[11,4], index: 0, kind: input, shape index: {}]
  %s1 = inlined_call_operand.vmem [shape: f32[2,16,16,4], index: 1, kind: input, shape index: {}]
  %s2 = inlined_call_operand.vmem [shape: f32[2,16,16,4], index: 2, kind: output, shape index: {}]
  %s3 = sld [smem:[#allocation0]]
  $region41: #{repvggdw_forward.1} parent=0
    _
  %s5 = ssub.s32 1, %s3
  %s6 = scalar_select 0, %s5, %s3
  loop: start=0, step=1, limit=4
  $region2: #{repvggdw_forward.1} parent=0 // loop_pre_header
    _
  $region3: #{repvggdw_forward.1} parent=0 // loop_header
    %s8 = sphi 0, %s12
    %p9 = scmp.ge.s32.totalorder %s8, 4
    %s15 = sphi 0, %s27
    %s16 = sphi 0, %s23
    %s17 = sphi 0, %s15
    %s18 = sphi 0, %s16
    %s19 = sphi 0, %s17
    %s20 = sphi 0, %s18
    %s30 = sphi 0, %s32
    %s33 = sphi 0, %s30
    %s34 = sphi 0, %s33
    %s50 = sphi 0, %s34
    %s58 = sphi 0, %s60
    %s61 = sphi 0, %s58
    %s62 = sphi 0, %s61
    %s78 = sphi 0, %s62
    %s86 = sphi 0, %s88
    %s89 = sphi 0, %s86
    %s90 = sphi 0, %s89
    %s106 = sphi 0, %s90
  $region4: #{repvggdw_forward.1} parent=0 // loop_header_branch
    %11 = sbr.rel (%p9) target = $region8
  $region5: #{repvggdw_forward.1} parent=0 // loop_body
    %s13 = ssub.s32 %s8, 1
    %s14 = ssub.s32 %s8, 2
    %s21 = sadd.s32 1, %s16
    %p22 = scmp.ge.s32.totalorder %s21, 1
    %s23 = scalar_select %p22, 0, %s21
    %s24 = sadd.s32 1, %s15
    %s25 = scalar_select %p22, %s24, %s15
    %p26 = scmp.ge.s32.totalorder %s25, 2
    %s27 = scalar_select %p26, 0, %s25
    %s28 = ssub.s32 %s16, %s23
    %p29 = scmp.eq.s32.totalorder %s28, 0
    %s31 = sadd.s32 %s30, 1
    %s32 = scalar_select %p29, %s30, %s31
    %p35 = pneg %p29
    %p36 = scmp.eq.s32.totalorder %s8, 1
    %p37 = por %p35, %p36
    %p38 = scmp.ne.s32.totalorder %s30, %s33
    %p39 = scmp.eq.s32.totalorder %s8, 0
    %p40 = por %p38, %p39
    %p41 = scmp.ne.s32.totalorder %s30, %s33
    %p42 = scmp.eq.s32.totalorder %s13, 1
    %p43 = por %p41, %p42
    %p44 = scmp.ne.s32.totalorder %s33, %s34
    %p45 = scmp.eq.s32.totalorder %s13, 0
    %p46 = por %p44, %p45
    %p47 = scmp.ne.s32.totalorder %s33, %s34
    %p48 = scmp.eq.s32.totalorder %s14, 1
    %p49 = por %p47, %p48
    %p51 = scmp.ne.s32.totalorder %s34, %s50
    %p52 = scmp.eq.s32.totalorder %s14, 0
    %p53 = por %p51, %p52
    %s54 = ssub.s32 %s15, %s27
    %s55 = ssub.s32 %s16, %s23
    %s56 = sor.u32 %s54, %s55
    %p57 = scmp.eq.s32.totalorder %s56, 0
    %s59 = sadd.s32 %s58, 1
    %s60 = scalar_select %p57, %s58, %s59
    %p63 = pneg %p57
    %p64 = scmp.eq.s32.totalorder %s8, 1
    %p65 = por %p63, %p64
    %p66 = scmp.ne.s32.totalorder %s58, %s61
    %p67 = scmp.eq.s32.totalorder %s8, 0
    %p68 = por %p66, %p67
    %p69 = scmp.ne.s32.totalorder %s58, %s61
    %p70 = scmp.eq.s32.totalorder %s13, 1
    %p71 = por %p69, %p70
    %p72 = scmp.ne.s32.totalorder %s61, %s62
    %p73 = scmp.eq.s32.totalorder %s13, 0
    %p74 = por %p72, %p73
    %p75 = scmp.ne.s32.totalorder %s61, %s62
    %p76 = scmp.eq.s32.totalorder %s14, 1
    %p77 = por %p75, %p76
    %p79 = scmp.ne.s32.totalorder %s62, %s78
    %p80 = scmp.eq.s32.totalorder %s14, 0
    %p81 = por %p79, %p80
    %s82 = ssub.s32 %s15, %s27
    %s83 = ssub.s32 %s16, %s23
    %s84 = sor.u32 %s82, %s83
    %p85 = scmp.eq.s32.totalorder %s84, 0
    %s87 = sadd.s32 %s86, 1
    %s88 = scalar_select %p85, %s86, %s87
    %p91 = pneg %p85
    %p92 = scmp.eq.s32.totalorder %s8, 1
    %p93 = por %p91, %p92
    %p94 = scmp.ne.s32.totalorder %s86, %s89
    %p95 = scmp.eq.s32.totalorder %s8, 0
    %p96 = por %p94, %p95
    %p97 = scmp.ne.s32.totalorder %s86, %s89
    %p98 = scmp.eq.s32.totalorder %s13, 1
    %p99 = por %p97, %p98
    %p100 = scmp.ne.s32.totalorder %s89, %s90
    %p101 = scmp.eq.s32.totalorder %s13, 0
    %p102 = por %p100, %p101
    %p103 = scmp.ne.s32.totalorder %s89, %s90
    %p104 = scmp.eq.s32.totalorder %s14, 1
    %p105 = por %p103, %p104
    %p107 = scmp.ne.s32.totalorder %s90, %s106
    %p108 = scmp.eq.s32.totalorder %s14, 0
    %p109 = por %p107, %p108
    %p110 = scmp.le.s32.totalorder 1, %s8
    %p111 = scmp.lt.s32.totalorder %s8, 3
    %p112 = pnand %p110, %p111
    %p113 = pneg %p112
    // Predicated region
    $region9: #{repvggdw_forward.1} parent=5 // pred_check
      _
    $region10: #{repvggdw_forward.1} parent=5 // pred_check_branch
      %115 = sbr.rel (%p112) target = $region12
    $region11: #{repvggdw_forward.1} parent=5 // pred_region
      %s116 = ssub.s32 %s8, 1
      // Predicated region
      $region13: #{repvggdw_forward.1} parent=11 // pred_check
        %p117 = pneg %p46
      $region14: #{repvggdw_forward.1} parent=11 // pred_check_branch
        %119 = sbr.rel (%p117) target = $region16
      $region15: #{repvggdw_forward.1} parent=11 // pred_region
        %p120 = scmp.lt.s32.totalorder %s18, 0
        %s121 = scalar_select %p120, %s18, 0
        %s122 = smul.addr %s121, 8
        %s123 = scalar_lea.vmem %s0, %s122
      $region16: #{repvggdw_forward.1} parent=11 // pred_fallthru
        _
    $region12: #{repvggdw_forward.1} parent=5 // pred_fallthru
      _
    %p124 = scmp.lt.s32.totalorder %s8, 2
    // Predicated region
    $region17: #{repvggdw_forward.1} parent=5 // pred_check
      %p125 = pneg %p124
    $region18: #{repvggdw_forward.1} parent=5 // pred_check_branch
      %127 = sbr.rel (%p125) target = $region20
    $region19: #{repvggdw_forward.1} parent=5 // pred_region
      // Predicated region
      $region21: #{repvggdw_forward.1} parent=19 // pred_check
        %p128 = pneg %p68
      $region22: #{repvggdw_forward.1} parent=19 // pred_check_branch
        %130 = sbr.rel (%p128) target = $region24
      $region23: #{repvggdw_forward.1} parent=19 // pred_region
        %p131 = scmp.lt.s32.totalorder %s15, 1
        %s132 = scalar_select %p131, %s15, 1
        %p133 = scmp.lt.s32.totalorder %s16, 0
        %s134 = scalar_select %p133, %s16, 0
        %s135 = smul.addr %s132, 32
        %s136 = sadd.s32 %s134, %s135
        %s137 = smul.addr %s136, 8
        %s138 = scalar_lea.vmem %s1, %s137
      $region24: #{repvggdw_forward.1} parent=19 // pred_fallthru
        _
    $region20: #{repvggdw_forward.1} parent=5 // pred_fallthru
      _
    %p139 = scmp.le.s32.totalorder 1, %s8
    %p140 = scmp.lt.s32.totalorder %s8, 3
    %p141 = pnand %p139, %p140
    %p142 = pneg %p141
    // Predicated region
    $region25: #{repvggdw_forward.1} parent=5 // pred_check
      _
    $region26: #{repvggdw_forward.1} parent=5 // pred_check_branch
      %144 = sbr.rel (%p141) target = $region28
    $region27: #{repvggdw_forward.1} parent=5 // pred_region
      %s145 = ssub.s32 %s8, 1
      %p146 = scmp.lt.s32.totalorder %s18, 0
      %s147 = scalar_select %p146, %s18, 0
      %s148 = smul.addr %s147, 8
      %s149 = scalar_lea.vmem %s0, %s148
      %p150 = pneg %p46
      %p151 = pneg %p43
      %p152 = scmp.lt.s32.totalorder %s17, 1
      %s153 = scalar_select %p152, %s17, 1
      %p154 = scmp.lt.s32.totalorder %s18, 0
      %s155 = scalar_select %p154, %s18, 0
      %s156 = smul.addr %s153, 32
      %s157 = sadd.s32 %s155, %s156
      %s158 = smul.addr %s157, 8
      %s159 = scalar_lea.vmem %s1, %s158
      %p160 = pneg %p74
      %p161 = pneg %p71
      %p162 = pneg %p102
      %p163 = pneg %p99
      %p164 = scmp.lt.s32.totalorder %s17, 1
      %s165 = scalar_select %p164, %s17, 1
      %p166 = scmp.lt.s32.totalorder %s18, 0
      %s167 = scalar_select %p166, %s18, 0
      %s168 = smul.addr %s165, 32
      %s169 = sadd.s32 %s167, %s168
      %s170 = smul.addr %s169, 8
      %s171 = scalar_lea.vmem %s2, %s170
      %p172 = scmp.lt.s32.totalorder %s18, 0
      %s173 = scalar_select %p172, %s18, 0
      %s174 = smul.addr %s173, 8
      %s175 = scalar_lea.vmem %s0, %s174
      %p176 = scmp.lt.s32.totalorder %s17, 1
      %s177 = scalar_select %p176, %s17, 1
      %p178 = scmp.lt.s32.totalorder %s18, 0
      %s179 = scalar_select %p178, %s18, 0
      %s180 = smul.addr %s177, 32
      %s181 = sadd.s32 %s179, %s180
      %s182 = smul.addr %s181, 8
      %s183 = scalar_lea.vmem %s1, %s182
      %p184 = scmp.lt.s32.totalorder %s17, 1
      %s185 = scalar_select %p184, %s17, 1
      %p186 = scmp.lt.s32.totalorder %s18, 0
      %s187 = scalar_select %p186, %s18, 0
      %s188 = smul.addr %s185, 32
      %s189 = sadd.s32 %s187, %s188
      %s190 = smul.addr %s189, 8
      %s191 = scalar_lea.vmem %s2, %s190
      %v192 = vld [vmem:[%s175] sm:$0x1]
      %v193 = vld [vmem:[%s175 + $0x1] sm:$0x1]
      %v194 = vld [vmem:[%s175 + $0x2] sm:$0x1]
      %v195 = vld [vmem:[%s175 + $0x3] sm:$0x1]
      %v196 = vld [vmem:[%s175 + $0x4] sm:$0x1]
      %v197 = vld [vmem:[%s175 + $0x5] sm:$0x1]
      %v198 = vld [vmem:[%s175 + $0x6] sm:$0x1]
      %v199 = vld [vmem:[%s175 + $0x7] sm:$0x1]
      %v200 = vld [vmem:[%s175 + $0x8] sm:$0x1]
      %v201 = vld [vmem:[%s175 + $0x9] sm:$0x1]
      %v202 = vld [vmem:[%s175 + $0xa] sm:$0x1]
      %v203 = vld [vmem:[%s183] sm:$0xff]
      %v204 = vld [vmem:[%s183 + $0x8] sm:$0xff]
      %v205 = vld [vmem:[%s183 + $0x10] sm:$0xff]
      %v206 = vld [vmem:[%s183 + $0x18] sm:$0xff]
      %v207 = vld [vmem:[%s183 + $0x20] sm:$0xff]
      %v208 = vld [vmem:[%s183 + $0x28] sm:$0xff]
      %v209 = vld [vmem:[%s183 + $0x30] sm:$0xff]
      %v210 = vld [vmem:[%s183 + $0x38] sm:$0xff]
      %v211 = vld [vmem:[%s183 + $0x40] sm:$0xff]
      %v212 = vld [vmem:[%s183 + $0x48] sm:$0xff]
      %v213 = vld [vmem:[%s183 + $0x50] sm:$0xff]
      %v214 = vld [vmem:[%s183 + $0x58] sm:$0xff]
      %v215 = vld [vmem:[%s183 + $0x60] sm:$0xff]
      %v216 = vld [vmem:[%s183 + $0x68] sm:$0xff]
      %v217 = vld [vmem:[%s183 + $0x70] sm:$0xff]
      %v218 = vld [vmem:[%s183 + $0x78] sm:$0xff]
      %v219 = vld [vmem:[%s183 + $0x80] sm:$0xff]
      %v220 = vld [vmem:[%s183 + $0x88] sm:$0xff]
      %vm240 = vcmask 1046528
      %v241 = vrot.slane 0.0, 1
      %v242 = vsel %vm240, %v241, %v241
      %v243 = vrot.slane %v203, 1
      %v244 = vrot.slane %v204, 1
      %v245 = vsel %vm240, %v243, %v244
      %v246 = vrot.slane %v205, 1
      %v247 = vrot.slane %v206, 1
      %v248 = vsel %vm240, %v246, %v247
      %v249 = vrot.slane %v207, 1
      %v250 = vrot.slane %v208, 1
      %v251 = vsel %vm240, %v249, %v250
      %v252 = vrot.slane %v209, 1
      %v253 = vrot.slane %v210, 1
      %v254 = vsel %vm240, %v252, %v253
      %v255 = vrot.slane %v211, 1
      %v256 = vrot.slane %v212, 1
      %v257 = vsel %vm240, %v255, %v256
      %v258 = vrot.slane %v213, 1
      %v259 = vrot.slane %v214, 1
      %v260 = vsel %vm240, %v258, %v259
      %v261 = vrot.slane %v215, 1
      %v262 = vrot.slane %v216, 1
      %v263 = vsel %vm240, %v261, %v262
      %v264 = vrot.slane %v217, 1
      %v265 = vrot.slane %v218, 1
      %v266 = vsel %vm240, %v264, %v265
      %v267 = vrot.slane %v219, 1
      %v268 = vrot.slane %v220, 1
      %v269 = vsel %vm240, %v267, %v268
      %v290 = vsel %vm240, %v241, 0.0
      %v291 = vsel %vm240, %v244, 0.0
      %v292 = vsel %vm240, %v247, 0.0
      %v293 = vsel %vm240, %v250, 0.0
      %v294 = vsel %vm240, %v253, 0.0
      %v295 = vsel %vm240, %v256, 0.0
      %v296 = vsel %vm240, %v259, 0.0
      %v297 = vsel %vm240, %v262, 0.0
      %v298 = vsel %vm240, %v265, 0.0
      %v299 = vsel %vm240, %v268, 0.0
      %vm300 = vcmask 1040384
      %v301 = vrot.slane 0.0, 7
      %v302 = vsel %vm300, %v301, %v301
      %v303 = vrot.slane %v203, 7
      %v304 = vrot.slane %v204, 7
      %v305 = vsel %vm300, %v303, %v304
      %v306 = vrot.slane %v205, 7
      %v307 = vrot.slane %v206, 7
      %v308 = vsel %vm300, %v306, %v307
      %v309 = vrot.slane %v207, 7
      %v310 = vrot.slane %v208, 7
      %v311 = vsel %vm300, %v309, %v310
      %v312 = vrot.slane %v209, 7
      %v313 = vrot.slane %v210, 7
      %v314 = vsel %vm300, %v312, %v313
      %v315 = vrot.slane %v211, 7
      %v316 = vrot.slane %v212, 7
      %v317 = vsel %vm300, %v315, %v316
      %v318 = vrot.slane %v213, 7
      %v319 = vrot.slane %v214, 7
      %v320 = vsel %vm300, %v318, %v319
      %v321 = vrot.slane %v215, 7
      %v322 = vrot.slane %v216, 7
      %v323 = vsel %vm300, %v321, %v322
      %v324 = vrot.slane %v217, 7
      %v325 = vrot.slane %v218, 7
      %v326 = vsel %vm300, %v324, %v325
      %v327 = vrot.slane %v219, 7
      %v328 = vrot.slane %v220, 7
      %v329 = vsel %vm300, %v327, %v328
      %v350 = vsel %vm300, 0.0, %v301
      %v351 = vsel %vm300, 0.0, %v303
      %v352 = vsel %vm300, 0.0, %v306
      %v353 = vsel %vm300, 0.0, %v309
      %v354 = vsel %vm300, 0.0, %v312
      %v355 = vsel %vm300, 0.0, %v315
      %v356 = vsel %vm300, 0.0, %v318
      %v357 = vsel %vm300, 0.0, %v321
      %v358 = vsel %vm300, 0.0, %v324
      %v359 = vsel %vm300, 0.0, %v327
      %v360 = vlaneseq
      %v361 = vshrl.u32 %v360, 7
      %v362 = vsub.s32 0, %v361
      %v363 = vrot.slane %v201, %v362
      %v364 = vmul.f32 %v203, %v363
      %v365 = vmul.f32 %v204, %v363
      %v366 = vmul.f32 %v205, %v363
      %v367 = vmul.f32 %v206, %v363
      %v368 = vmul.f32 %v207, %v363
      %v369 = vmul.f32 %v208, %v363
      %v370 = vmul.f32 %v209, %v363
      %v371 = vmul.f32 %v210, %v363
      %v372 = vmul.f32 %v211, %v363
      %v373 = vmul.f32 %v212, %v363
      %v374 = vmul.f32 %v213, %v363
      %v375 = vmul.f32 %v214, %v363
      %v376 = vmul.f32 %v215, %v363
      %v377 = vmul.f32 %v216, %v363
      %v378 = vmul.f32 %v217, %v363
      %v379 = vmul.f32 %v218, %v363
      %v380 = vlaneseq
      %v381 = vshrl.u32 %v380, 7
      %v382 = vsub.s32 0, %v381
      %v383 = vrot.slane %v202, %v382
      %v384 = vadd.f32 %v364, %v383
      %v385 = vadd.f32 %v365, %v383
      %v386 = vadd.f32 %v366, %v383
      %v387 = vadd.f32 %v367, %v383
      %v388 = vadd.f32 %v368, %v383
      %v389 = vadd.f32 %v369, %v383
      %v390 = vadd.f32 %v370, %v383
      %v391 = vadd.f32 %v371, %v383
      %v392 = vadd.f32 %v372, %v383
      %v393 = vadd.f32 %v373, %v383
      %v394 = vadd.f32 %v374, %v383
      %v395 = vadd.f32 %v375, %v383
      %v396 = vadd.f32 %v376, %v383
      %v397 = vadd.f32 %v377, %v383
      %v398 = vadd.f32 %v378, %v383
      %v399 = vadd.f32 %v379, %v383
      %v400 = vlaneseq
      %v401 = vshrl.u32 %v400, 7
      %v402 = vsub.s32 0, %v401
      %v403 = vrot.slane %v192, %v402
      %v404 = vmul.f32 %v403, %v350
      %v405 = vmul.f32 %v403, %v302
      %v406 = vmul.f32 %v403, %v351
      %v407 = vmul.f32 %v403, %v305
      %v408 = vmul.f32 %v403, %v352
      %v409 = vmul.f32 %v403, %v308
      %v410 = vmul.f32 %v403, %v353
      %v411 = vmul.f32 %v403, %v311
      %v412 = vmul.f32 %v403, %v354
      %v413 = vmul.f32 %v403, %v314
      %v414 = vmul.f32 %v403, %v355
      %v415 = vmul.f32 %v403, %v317
      %v416 = vmul.f32 %v403, %v356
      %v417 = vmul.f32 %v403, %v320
      %v418 = vmul.f32 %v403, %v357
      %v419 = vmul.f32 %v403, %v323
      %v420 = vadd.f32 %v384, %v404
      %v421 = vadd.f32 %v385, %v405
      %v422 = vadd.f32 %v386, %v406
      %v423 = vadd.f32 %v387, %v407
      %v424 = vadd.f32 %v388, %v408
      %v425 = vadd.f32 %v389, %v409
      %v426 = vadd.f32 %v390, %v410
      %v427 = vadd.f32 %v391, %v411
      %v428 = vadd.f32 %v392, %v412
      %v429 = vadd.f32 %v393, %v413
      %v430 = vadd.f32 %v394, %v414
      %v431 = vadd.f32 %v395, %v415
      %v432 = vadd.f32 %v396, %v416
      %v433 = vadd.f32 %v397, %v417
      %v434 = vadd.f32 %v398, %v418
      %v435 = vadd.f32 %v399, %v419
      %v436 = vlaneseq
      %v437 = vshrl.u32 %v436, 7
      %v438 = vsub.s32 0, %v437
      %v439 = vrot.slane %v193, %v438
      %v440 = vmul.f32 %v439, 0.0
      %v441 = vmul.f32 %v439, %v203
      %v442 = vmul.f32 %v439, %v204
      %v443 = vmul.f32 %v439, %v205
      %v444 = vmul.f32 %v439, %v206
      %v445 = vmul.f32 %v439, %v207
      %v446 = vmul.f32 %v439, %v208
      %v447 = vmul.f32 %v439, %v209
      %v448 = vmul.f32 %v439, %v210
      %v449 = vmul.f32 %v439, %v211
      %v450 = vmul.f32 %v439, %v212
      %v451 = vmul.f32 %v439, %v213
      %v452 = vmul.f32 %v439, %v214
      %v453 = vmul.f32 %v439, %v215
      %v454 = vmul.f32 %v439, %v216
      %v455 = vadd.f32 %v420, %v440
      %v456 = vadd.f32 %v421, %v440
      %v457 = vadd.f32 %v422, %v441
      %v458 = vadd.f32 %v423, %v442
      %v459 = vadd.f32 %v424, %v443
      %v460 = vadd.f32 %v425, %v444
      %v461 = vadd.f32 %v426, %v445
      %v462 = vadd.f32 %v427, %v446
      %v463 = vadd.f32 %v428, %v447
      %v464 = vadd.f32 %v429, %v448
      %v465 = vadd.f32 %v430, %v449
      %v466 = vadd.f32 %v431, %v450
      %v467 = vadd.f32 %v432, %v451
      %v468 = vadd.f32 %v433, %v452
      %v469 = vadd.f32 %v434, %v453
      %v470 = vadd.f32 %v435, %v454
      %v471 = vlaneseq
      %v472 = vshrl.u32 %v471, 7
      %v473 = vsub.s32 0, %v472
      %v474 = vrot.slane %v194, %v473
      %v475 = vmul.f32 %v474, %v242
      %v476 = vmul.f32 %v474, %v290
      %v477 = vmul.f32 %v474, %v245
      %v478 = vmul.f32 %v474, %v291
      %v479 = vmul.f32 %v474, %v248
      %v480 = vmul.f32 %v474, %v292
      %v481 = vmul.f32 %v474, %v251
      %v482 = vmul.f32 %v474, %v293
      %v483 = vmul.f32 %v474, %v254
      %v484 = vmul.f32 %v474, %v294
      %v485 = vmul.f32 %v474, %v257
      %v486 = vmul.f32 %v474, %v295
      %v487 = vmul.f32 %v474, %v260
      %v488 = vmul.f32 %v474, %v296
      %v489 = vmul.f32 %v474, %v263
      %v490 = vmul.f32 %v474, %v297
      %v491 = vadd.f32 %v455, %v475
      %v492 = vadd.f32 %v456, %v476
      %v493 = vadd.f32 %v457, %v477
      %v494 = vadd.f32 %v458, %v478
      %v495 = vadd.f32 %v459, %v479
      %v496 = vadd.f32 %v460, %v480
      %v497 = vadd.f32 %v461, %v481
      %v498 = vadd.f32 %v462, %v482
      %v499 = vadd.f32 %v463, %v483
      %v500 = vadd.f32 %v464, %v484
      %v501 = vadd.f32 %v465, %v485
      %v502 = vadd.f32 %v466, %v486
      %v503 = vadd.f32 %v467, %v487
      %v504 = vadd.f32 %v468, %v488
      %v505 = vadd.f32 %v469, %v489
      %v506 = vadd.f32 %v470, %v490
      %v507 = vlaneseq
      %v508 = vshrl.u32 %v507, 7
      %v509 = vsub.s32 0, %v508
      %v510 = vrot.slane %v195, %v509
      %v511 = vmul.f32 %v510, %v351
      %v512 = vmul.f32 %v510, %v305
      %v513 = vmul.f32 %v510, %v352
      %v514 = vmul.f32 %v510, %v308
      %v515 = vmul.f32 %v510, %v353
      %v516 = vmul.f32 %v510, %v311
      %v517 = vmul.f32 %v510, %v354
      %v518 = vmul.f32 %v510, %v314
      %v519 = vmul.f32 %v510, %v355
      %v520 = vmul.f32 %v510, %v317
      %v521 = vmul.f32 %v510, %v356
      %v522 = vmul.f32 %v510, %v320
      %v523 = vmul.f32 %v510, %v357
      %v524 = vmul.f32 %v510, %v323
      %v525 = vmul.f32 %v510, %v358
      %v526 = vmul.f32 %v510, %v326
      %v527 = vadd.f32 %v491, %v511
      %v528 = vadd.f32 %v492, %v512
      %v529 = vadd.f32 %v493, %v513
      %v530 = vadd.f32 %v494, %v514
      %v531 = vadd.f32 %v495, %v515
      %v532 = vadd.f32 %v496, %v516
      %v533 = vadd.f32 %v497, %v517
      %v534 = vadd.f32 %v498, %v518
      %v535 = vadd.f32 %v499, %v519
      %v536 = vadd.f32 %v500, %v520
      %v537 = vadd.f32 %v501, %v521
      %v538 = vadd.f32 %v502, %v522
      %v539 = vadd.f32 %v503, %v523
      %v540 = vadd.f32 %v504, %v524
      %v541 = vadd.f32 %v505, %v525
      %v542 = vadd.f32 %v506, %v526
      %v543 = vlaneseq
      %v544 = vshrl.u32 %v543, 7
      %v545 = vsub.s32 0, %v544
      %v546 = vrot.slane %v196, %v545
      %v547 = vmul.f32 %v546, %v203
      %v548 = vmul.f32 %v546, %v204
      %v549 = vmul.f32 %v546, %v205
      %v550 = vmul.f32 %v546, %v206
      %v551 = vmul.f32 %v546, %v207
      %v552 = vmul.f32 %v546, %v208
      %v553 = vmul.f32 %v546, %v209
      %v554 = vmul.f32 %v546, %v210
      %v555 = vmul.f32 %v546, %v211
      %v556 = vmul.f32 %v546, %v212
      %v557 = vmul.f32 %v546, %v213
      %v558 = vmul.f32 %v546, %v214
      %v559 = vmul.f32 %v546, %v215
      %v560 = vmul.f32 %v546, %v216
      %v561 = vmul.f32 %v546, %v217
      %v562 = vmul.f32 %v546, %v218
      %v563 = vadd.f32 %v527, %v547
      %v564 = vadd.f32 %v528, %v548
      %v565 = vadd.f32 %v529, %v549
      %v566 = vadd.f32 %v530, %v550
      %v567 = vadd.f32 %v531, %v551
      %v568 = vadd.f32 %v532, %v552
      %v569 = vadd.f32 %v533, %v553
      %v570 = vadd.f32 %v534, %v554
      %v571 = vadd.f32 %v535, %v555
      %v572 = vadd.f32 %v536, %v556
      %v573 = vadd.f32 %v537, %v557
      %v574 = vadd.f32 %v538, %v558
      %v575 = vadd.f32 %v539, %v559
      %v576 = vadd.f32 %v540, %v560
      %v577 = vadd.f32 %v541, %v561
      %v578 = vadd.f32 %v542, %v562
      %v579 = vlaneseq
      %v580 = vshrl.u32 %v579, 7
      %v581 = vsub.s32 0, %v580
      %v582 = vrot.slane %v197, %v581
      %v583 = vmul.f32 %v582, %v245
      %v584 = vmul.f32 %v582, %v291
      %v585 = vmul.f32 %v582, %v248
      %v586 = vmul.f32 %v582, %v292
      %v587 = vmul.f32 %v582, %v251
      %v588 = vmul.f32 %v582, %v293
      %v589 = vmul.f32 %v582, %v254
      %v590 = vmul.f32 %v582, %v294
      %v591 = vmul.f32 %v582, %v257
      %v592 = vmul.f32 %v582, %v295
      %v593 = vmul.f32 %v582, %v260
      %v594 = vmul.f32 %v582, %v296
      %v595 = vmul.f32 %v582, %v263
      %v596 = vmul.f32 %v582, %v297
      %v597 = vmul.f32 %v582, %v266
      %v598 = vmul.f32 %v582, %v298
      %v599 = vadd.f32 %v563, %v583
      %v600 = vadd.f32 %v564, %v584
      %v601 = vadd.f32 %v565, %v585
      %v602 = vadd.f32 %v566, %v586
      %v603 = vadd.f32 %v567, %v587
      %v604 = vadd.f32 %v568, %v588
      %v605 = vadd.f32 %v569, %v589
      %v606 = vadd.f32 %v570, %v590
      %v607 = vadd.f32 %v571, %v591
      %v608 = vadd.f32 %v572, %v592
      %v609 = vadd.f32 %v573, %v593
      %v610 = vadd.f32 %v574, %v594
      %v611 = vadd.f32 %v575, %v595
      %v612 = vadd.f32 %v576, %v596
      %v613 = vadd.f32 %v577, %v597
      %v614 = vadd.f32 %v578, %v598
      %v615 = vlaneseq
      %v616 = vshrl.u32 %v615, 7
      %v617 = vsub.s32 0, %v616
      %v618 = vrot.slane %v198, %v617
      %v619 = vmul.f32 %v618, %v352
      %v620 = vmul.f32 %v618, %v308
      %v621 = vmul.f32 %v618, %v353
      %v622 = vmul.f32 %v618, %v311
      %v623 = vmul.f32 %v618, %v354
      %v624 = vmul.f32 %v618, %v314
      %v625 = vmul.f32 %v618, %v355
      %v626 = vmul.f32 %v618, %v317
      %v627 = vmul.f32 %v618, %v356
      %v628 = vmul.f32 %v618, %v320
      %v629 = vmul.f32 %v618, %v357
      %v630 = vmul.f32 %v618, %v323
      %v631 = vmul.f32 %v618, %v358
      %v632 = vmul.f32 %v618, %v326
      %v633 = vmul.f32 %v618, %v359
      %v634 = vmul.f32 %v618, %v329
      %v635 = vadd.f32 %v599, %v619
      %v636 = vadd.f32 %v600, %v620
      %v637 = vadd.f32 %v601, %v621
      %v638 = vadd.f32 %v602, %v622
      %v639 = vadd.f32 %v603, %v623
      %v640 = vadd.f32 %v604, %v624
      %v641 = vadd.f32 %v605, %v625
      %v642 = vadd.f32 %v606, %v626
      %v643 = vadd.f32 %v607, %v627
      %v644 = vadd.f32 %v608, %v628
      %v645 = vadd.f32 %v609, %v629
      %v646 = vadd.f32 %v610, %v630
      %v647 = vadd.f32 %v611, %v631
      %v648 = vadd.f32 %v612, %v632
      %v649 = vadd.f32 %v613, %v633
      %v650 = vadd.f32 %v614, %v634
      %v651 = vlaneseq
      %v652 = vshrl.u32 %v651, 7
      %v653 = vsub.s32 0, %v652
      %v654 = vrot.slane %v199, %v653
      %v655 = vmul.f32 %v654, %v205
      %v656 = vmul.f32 %v654, %v206
      %v657 = vmul.f32 %v654, %v207
      %v658 = vmul.f32 %v654, %v208
      %v659 = vmul.f32 %v654, %v209
      %v660 = vmul.f32 %v654, %v210
      %v661 = vmul.f32 %v654, %v211
      %v662 = vmul.f32 %v654, %v212
      %v663 = vmul.f32 %v654, %v213
      %v664 = vmul.f32 %v654, %v214
      %v665 = vmul.f32 %v654, %v215
      %v666 = vmul.f32 %v654, %v216
      %v667 = vmul.f32 %v654, %v217
      %v668 = vmul.f32 %v654, %v218
      %v669 = vmul.f32 %v654, %v219
      %v670 = vmul.f32 %v654, %v220
      %v671 = vadd.f32 %v635, %v655
      %v672 = vadd.f32 %v636, %v656
      %v673 = vadd.f32 %v637, %v657
      %v674 = vadd.f32 %v638, %v658
      %v675 = vadd.f32 %v639, %v659
      %v676 = vadd.f32 %v640, %v660
      %v677 = vadd.f32 %v641, %v661
      %v678 = vadd.f32 %v642, %v662
      %v679 = vadd.f32 %v643, %v663
      %v680 = vadd.f32 %v644, %v664
      %v681 = vadd.f32 %v645, %v665
      %v682 = vadd.f32 %v646, %v666
      %v683 = vadd.f32 %v647, %v667
      %v684 = vadd.f32 %v648, %v668
      %v685 = vadd.f32 %v649, %v669
      %v686 = vadd.f32 %v650, %v670
      %v687 = vlaneseq
      %v688 = vshrl.u32 %v687, 7
      %v689 = vsub.s32 0, %v688
      %v690 = vrot.slane %v200, %v689
      %v691 = vmul.f32 %v690, %v248
      %v692 = vmul.f32 %v690, %v292
      %v693 = vmul.f32 %v690, %v251
      %v694 = vmul.f32 %v690, %v293
      %v695 = vmul.f32 %v690, %v254
      %v696 = vmul.f32 %v690, %v294
      %v697 = vmul.f32 %v690, %v257
      %v698 = vmul.f32 %v690, %v295
      %v699 = vmul.f32 %v690, %v260
      %v700 = vmul.f32 %v690, %v296
      %v701 = vmul.f32 %v690, %v263
      %v702 = vmul.f32 %v690, %v297
      %v703 = vmul.f32 %v690, %v266
      %v704 = vmul.f32 %v690, %v298
      %v705 = vmul.f32 %v690, %v269
      %v706 = vmul.f32 %v690, %v299
      %v707 = vadd.f32 %v671, %v691
      %v708 = vadd.f32 %v672, %v692
      %v709 = vadd.f32 %v673, %v693
      %v710 = vadd.f32 %v674, %v694
      %v711 = vadd.f32 %v675, %v695
      %v712 = vadd.f32 %v676, %v696
      %v713 = vadd.f32 %v677, %v697
      %v714 = vadd.f32 %v678, %v698
      %v715 = vadd.f32 %v679, %v699
      %v716 = vadd.f32 %v680, %v700
      %v717 = vadd.f32 %v681, %v701
      %v718 = vadd.f32 %v682, %v702
      %v719 = vadd.f32 %v683, %v703
      %v720 = vadd.f32 %v684, %v704
      %v721 = vadd.f32 %v685, %v705
      %v722 = vadd.f32 %v686, %v706
      %vm723 = vcmask 31744
      %724 = vst.msk [vmem:[%s191] sm:$0xff] %vm723, %v707
      %725 = vst.msk [vmem:[%s191 + $0x8] sm:$0xff] %vm723, %v708
      %726 = vst.msk [vmem:[%s191 + $0x10] sm:$0xff] %vm723, %v709
      %727 = vst.msk [vmem:[%s191 + $0x18] sm:$0xff] %vm723, %v710
      %728 = vst.msk [vmem:[%s191 + $0x20] sm:$0xff] %vm723, %v711
      %729 = vst.msk [vmem:[%s191 + $0x28] sm:$0xff] %vm723, %v712
      %730 = vst.msk [vmem:[%s191 + $0x30] sm:$0xff] %vm723, %v713
      %731 = vst.msk [vmem:[%s191 + $0x38] sm:$0xff] %vm723, %v714
      %732 = vst.msk [vmem:[%s191 + $0x40] sm:$0xff] %vm723, %v715
      %733 = vst.msk [vmem:[%s191 + $0x48] sm:$0xff] %vm723, %v716
      %734 = vst.msk [vmem:[%s191 + $0x50] sm:$0xff] %vm723, %v717
      %735 = vst.msk [vmem:[%s191 + $0x58] sm:$0xff] %vm723, %v718
      %736 = vst.msk [vmem:[%s191 + $0x60] sm:$0xff] %vm723, %v719
      %737 = vst.msk [vmem:[%s191 + $0x68] sm:$0xff] %vm723, %v720
      %738 = vst.msk [vmem:[%s191 + $0x70] sm:$0xff] %vm723, %v721
      %739 = vst.msk [vmem:[%s191 + $0x78] sm:$0xff] %vm723, %v722
      %s740 = scalar_lea.vmem %s183, 112
      %v741 = vld [vmem:[%s740] sm:$0xff]
      %v742 = vld [vmem:[%s740 + $0x8] sm:$0xff]
      %v743 = vld [vmem:[%s740 + $0x10] sm:$0xff]
      %v744 = vld [vmem:[%s740 + $0x18] sm:$0xff]
      %v745 = vld [vmem:[%s740 + $0x20] sm:$0xff]
      %v746 = vld [vmem:[%s740 + $0x28] sm:$0xff]
      %v747 = vld [vmem:[%s740 + $0x30] sm:$0xff]
      %v748 = vld [vmem:[%s740 + $0x38] sm:$0xff]
      %v749 = vld [vmem:[%s740 + $0x40] sm:$0xff]
      %v750 = vld [vmem:[%s740 + $0x48] sm:$0xff]
      %v751 = vld [vmem:[%s740 + $0x50] sm:$0xff]
      %v752 = vld [vmem:[%s740 + $0x58] sm:$0xff]
      %v753 = vld [vmem:[%s740 + $0x60] sm:$0xff]
      %v754 = vld [vmem:[%s740 + $0x68] sm:$0xff]
      %v755 = vld [vmem:[%s740 + $0x70] sm:$0xff]
      %v756 = vld [vmem:[%s740 + $0x78] sm:$0xff]
      %v757 = vld [vmem:[%s740 + $0x80] sm:$0xff]
      %v758 = vld [vmem:[%s740 + $0x88] sm:$0xff]
      %v777 = vrot.slane %v741, 1
      %v778 = vrot.slane %v742, 1
      %v779 = vsel %vm240, %v777, %v778
      %v780 = vrot.slane %v743, 1
      %v781 = vrot.slane %v744, 1
      %v782 = vsel %vm240, %v780, %v781
      %v783 = vrot.slane %v745, 1
      %v784 = vrot.slane %v746, 1
      %v785 = vsel %vm240, %v783, %v784
      %v786 = vrot.slane %v747, 1
      %v787 = vrot.slane %v748, 1
      %v788 = vsel %vm240, %v786, %v787
      %v789 = vrot.slane %v749, 1
      %v790 = vrot.slane %v750, 1
      %v791 = vsel %vm240, %v789, %v790
      %v792 = vrot.slane %v751, 1
      %v793 = vrot.slane %v752, 1
      %v794 = vsel %vm240, %v792, %v793
      %v795 = vrot.slane %v753, 1
      %v796 = vrot.slane %v754, 1
      %v797 = vsel %vm240, %v795, %v796
      %v798 = vrot.slane %v755, 1
      %v799 = vrot.slane %v756, 1
      %v800 = vsel %vm240, %v798, %v799
      %v801 = vrot.slane %v757, 1
      %v802 = vrot.slane %v758, 1
      %v803 = vsel %vm240, %v801, %v802
      %v822 = vsel %vm240, %v778, 0.0
      %v823 = vsel %vm240, %v781, 0.0
      %v824 = vsel %vm240, %v784, 0.0
      %v825 = vsel %vm240, %v787, 0.0
      %v826 = vsel %vm240, %v790, 0.0
      %v827 = vsel %vm240, %v793, 0.0
      %v828 = vsel %vm240, %v796, 0.0
      %v829 = vsel %vm240, %v799, 0.0
      %v830 = vsel %vm240, %v802, 0.0
      %v831 = vrot.slane %v741, 7
      %v832 = vrot.slane %v742, 7
      %v833 = vsel %vm300, %v831, %v832
      %v834 = vrot.slane %v743, 7
      %v835 = vrot.slane %v744, 7
      %v836 = vsel %vm300, %v834, %v835
      %v837 = vrot.slane %v745, 7
      %v838 = vrot.slane %v746, 7
      %v839 = vsel %vm300, %v837, %v838
      %v840 = vrot.slane %v747, 7
      %v841 = vrot.slane %v748, 7
      %v842 = vsel %vm300, %v840, %v841
      %v843 = vrot.slane %v749, 7
      %v844 = vrot.slane %v750, 7
      %v845 = vsel %vm300, %v843, %v844
      %v846 = vrot.slane %v751, 7
      %v847 = vrot.slane %v752, 7
      %v848 = vsel %vm300, %v846, %v847
      %v849 = vrot.slane %v753, 7
      %v850 = vrot.slane %v754, 7
      %v851 = vsel %vm300, %v849, %v850
      %v852 = vrot.slane %v755, 7
      %v853 = vrot.slane %v756, 7
      %v854 = vsel %vm300, %v852, %v853
      %v855 = vrot.slane %v757, 7
      %v856 = vrot.slane %v758, 7
      %v857 = vsel %vm300, %v855, %v856
      %v876 = vsel %vm300, 0.0, %v831
      %v877 = vsel %vm300, 0.0, %v834
      %v878 = vsel %vm300, 0.0, %v837
      %v879 = vsel %vm300, 0.0, %v840
      %v880 = vsel %vm300, 0.0, %v843
      %v881 = vsel %vm300, 0.0, %v846
      %v882 = vsel %vm300, 0.0, %v849
      %v883 = vsel %vm300, 0.0, %v852
      %v884 = vsel %vm300, 0.0, %v855
      %v885 = vmul.f32 %v743, %v363
      %v886 = vmul.f32 %v744, %v363
      %v887 = vmul.f32 %v745, %v363
      %v888 = vmul.f32 %v746, %v363
      %v889 = vmul.f32 %v747, %v363
      %v890 = vmul.f32 %v748, %v363
      %v891 = vmul.f32 %v749, %v363
      %v892 = vmul.f32 %v750, %v363
      %v893 = vmul.f32 %v751, %v363
      %v894 = vmul.f32 %v752, %v363
      %v895 = vmul.f32 %v753, %v363
      %v896 = vmul.f32 %v754, %v363
      %v897 = vmul.f32 %v755, %v363
      %v898 = vmul.f32 %v756, %v363
      %v899 = vmul.f32 %v757, %v363
      %v900 = vmul.f32 %v758, %v363
      %v901 = vadd.f32 %v885, %v383
      %v902 = vadd.f32 %v886, %v383
      %v903 = vadd.f32 %v887, %v383
      %v904 = vadd.f32 %v888, %v383
      %v905 = vadd.f32 %v889, %v383
      %v906 = vadd.f32 %v890, %v383
      %v907 = vadd.f32 %v891, %v383
      %v908 = vadd.f32 %v892, %v383
      %v909 = vadd.f32 %v893, %v383
      %v910 = vadd.f32 %v894, %v383
      %v911 = vadd.f32 %v895, %v383
      %v912 = vadd.f32 %v896, %v383
      %v913 = vadd.f32 %v897, %v383
      %v914 = vadd.f32 %v898, %v383
      %v915 = vadd.f32 %v899, %v383
      %v916 = vadd.f32 %v900, %v383
      %v917 = vmul.f32 %v403, %v876
      %v918 = vmul.f32 %v403, %v833
      %v919 = vmul.f32 %v403, %v877
      %v920 = vmul.f32 %v403, %v836
      %v921 = vmul.f32 %v403, %v878
      %v922 = vmul.f32 %v403, %v839
      %v923 = vmul.f32 %v403, %v879
      %v924 = vmul.f32 %v403, %v842
      %v925 = vmul.f32 %v403, %v880
      %v926 = vmul.f32 %v403, %v845
      %v927 = vmul.f32 %v403, %v881
      %v928 = vmul.f32 %v403, %v848
      %v929 = vmul.f32 %v403, %v882
      %v930 = vmul.f32 %v403, %v851
      %v931 = vmul.f32 %v403, %v883
      %v932 = vmul.f32 %v403, %v854
      %v933 = vadd.f32 %v901, %v917
      %v934 = vadd.f32 %v902, %v918
      %v935 = vadd.f32 %v903, %v919
      %v936 = vadd.f32 %v904, %v920
      %v937 = vadd.f32 %v905, %v921
      %v938 = vadd.f32 %v906, %v922
      %v939 = vadd.f32 %v907, %v923
      %v940 = vadd.f32 %v908, %v924
      %v941 = vadd.f32 %v909, %v925
      %v942 = vadd.f32 %v910, %v926
      %v943 = vadd.f32 %v911, %v927
      %v944 = vadd.f32 %v912, %v928
      %v945 = vadd.f32 %v913, %v929
      %v946 = vadd.f32 %v914, %v930
      %v947 = vadd.f32 %v915, %v931
      %v948 = vadd.f32 %v916, %v932
      %v949 = vmul.f32 %v439, %v741
      %v950 = vmul.f32 %v439, %v742
      %v951 = vmul.f32 %v439, %v743
      %v952 = vmul.f32 %v439, %v744
      %v953 = vmul.f32 %v439, %v745
      %v954 = vmul.f32 %v439, %v746
      %v955 = vmul.f32 %v439, %v747
      %v956 = vmul.f32 %v439, %v748
      %v957 = vmul.f32 %v439, %v749
      %v958 = vmul.f32 %v439, %v750
      %v959 = vmul.f32 %v439, %v751
      %v960 = vmul.f32 %v439, %v752
      %v961 = vmul.f32 %v439, %v753
      %v962 = vmul.f32 %v439, %v754
      %v963 = vmul.f32 %v439, %v755
      %v964 = vmul.f32 %v439, %v756
      %v965 = vadd.f32 %v933, %v949
      %v966 = vadd.f32 %v934, %v950
      %v967 = vadd.f32 %v935, %v951
      %v968 = vadd.f32 %v936, %v952
      %v969 = vadd.f32 %v937, %v953
      %v970 = vadd.f32 %v938, %v954
      %v971 = vadd.f32 %v939, %v955
      %v972 = vadd.f32 %v940, %v956
      %v973 = vadd.f32 %v941, %v957
      %v974 = vadd.f32 %v942, %v958
      %v975 = vadd.f32 %v943, %v959
      %v976 = vadd.f32 %v944, %v960
      %v977 = vadd.f32 %v945, %v961
      %v978 = vadd.f32 %v946, %v962
      %v979 = vadd.f32 %v947, %v963
      %v980 = vadd.f32 %v948, %v964
      %v981 = vmul.f32 %v474, %v779
      %v982 = vmul.f32 %v474, %v822
      %v983 = vmul.f32 %v474, %v782
      %v984 = vmul.f32 %v474, %v823
      %v985 = vmul.f32 %v474, %v785
      %v986 = vmul.f32 %v474, %v824
      %v987 = vmul.f32 %v474, %v788
      %v988 = vmul.f32 %v474, %v825
      %v989 = vmul.f32 %v474, %v791
      %v990 = vmul.f32 %v474, %v826
      %v991 = vmul.f32 %v474, %v794
      %v992 = vmul.f32 %v474, %v827
      %v993 = vmul.f32 %v474, %v797
      %v994 = vmul.f32 %v474, %v828
      %v995 = vmul.f32 %v474, %v800
      %v996 = vmul.f32 %v474, %v829
      %v997 = vadd.f32 %v965, %v981
      %v998 = vadd.f32 %v966, %v982
      %v999 = vadd.f32 %v967, %v983
      %v1000 = vadd.f32 %v968, %v984
      %v1001 = vadd.f32 %v969, %v985
      %v1002 = vadd.f32 %v970, %v986
      %v1003 = vadd.f32 %v971, %v987
      %v1004 = vadd.f32 %v972, %v988
      %v1005 = vadd.f32 %v973, %v989
      %v1006 = vadd.f32 %v974, %v990
      %v1007 = vadd.f32 %v975, %v991
      %v1008 = vadd.f32 %v976, %v992
      %v1009 = vadd.f32 %v977, %v993
      %v1010 = vadd.f32 %v978, %v994
      %v1011 = vadd.f32 %v979, %v995
      %v1012 = vadd.f32 %v980, %v996
      %v1013 = vmul.f32 %v510, %v877
      %v1014 = vmul.f32 %v510, %v836
      %v1015 = vmul.f32 %v510, %v878
      %v1016 = vmul.f32 %v510, %v839
      %v1017 = vmul.f32 %v510, %v879
      %v1018 = vmul.f32 %v510, %v842
      %v1019 = vmul.f32 %v510, %v880
      %v1020 = vmul.f32 %v510, %v845
      %v1021 = vmul.f32 %v510, %v881
      %v1022 = vmul.f32 %v510, %v848
      %v1023 = vmul.f32 %v510, %v882
      %v1024 = vmul.f32 %v510, %v851
      %v1025 = vmul.f32 %v510, %v883
      %v1026 = vmul.f32 %v510, %v854
      %v1027 = vmul.f32 %v510, %v884
      %v1028 = vmul.f32 %v510, %v857
      %v1029 = vadd.f32 %v997, %v1013
      %v1030 = vadd.f32 %v998, %v1014
      %v1031 = vadd.f32 %v999, %v1015
      %v1032 = vadd.f32 %v1000, %v1016
      %v1033 = vadd.f32 %v1001, %v1017
      %v1034 = vadd.f32 %v1002, %v1018
      %v1035 = vadd.f32 %v1003, %v1019
      %v1036 = vadd.f32 %v1004, %v1020
      %v1037 = vadd.f32 %v1005, %v1021
      %v1038 = vadd.f32 %v1006, %v1022
      %v1039 = vadd.f32 %v1007, %v1023
      %v1040 = vadd.f32 %v1008, %v1024
      %v1041 = vadd.f32 %v1009, %v1025
      %v1042 = vadd.f32 %v1010, %v1026
      %v1043 = vadd.f32 %v1011, %v1027
      %v1044 = vadd.f32 %v1012, %v1028
      %v1045 = vmul.f32 %v546, %v743
      %v1046 = vmul.f32 %v546, %v744
      %v1047 = vmul.f32 %v546, %v745
      %v1048 = vmul.f32 %v546, %v746
      %v1049 = vmul.f32 %v546, %v747
      %v1050 = vmul.f32 %v546, %v748
      %v1051 = vmul.f32 %v546, %v749
      %v1052 = vmul.f32 %v546, %v750
      %v1053 = vmul.f32 %v546, %v751
      %v1054 = vmul.f32 %v546, %v752
      %v1055 = vmul.f32 %v546, %v753
      %v1056 = vmul.f32 %v546, %v754
      %v1057 = vmul.f32 %v546, %v755
      %v1058 = vmul.f32 %v546, %v756
      %v1059 = vmul.f32 %v546, %v757
      %v1060 = vmul.f32 %v546, %v758
      %v1061 = vadd.f32 %v1029, %v1045
      %v1062 = vadd.f32 %v1030, %v1046
      %v1063 = vadd.f32 %v1031, %v1047
      %v1064 = vadd.f32 %v1032, %v1048
      %v1065 = vadd.f32 %v1033, %v1049
      %v1066 = vadd.f32 %v1034, %v1050
      %v1067 = vadd.f32 %v1035, %v1051
      %v1068 = vadd.f32 %v1036, %v1052
      %v1069 = vadd.f32 %v1037, %v1053
      %v1070 = vadd.f32 %v1038, %v1054
      %v1071 = vadd.f32 %v1039, %v1055
      %v1072 = vadd.f32 %v1040, %v1056
      %v1073 = vadd.f32 %v1041, %v1057
      %v1074 = vadd.f32 %v1042, %v1058
      %v1075 = vadd.f32 %v1043, %v1059
      %v1076 = vadd.f32 %v1044, %v1060
      %v1077 = vmul.f32 %v582, %v782
      %v1078 = vmul.f32 %v582, %v823
      %v1079 = vmul.f32 %v582, %v785
      %v1080 = vmul.f32 %v582, %v824
      %v1081 = vmul.f32 %v582, %v788
      %v1082 = vmul.f32 %v582, %v825
      %v1083 = vmul.f32 %v582, %v791
      %v1084 = vmul.f32 %v582, %v826
      %v1085 = vmul.f32 %v582, %v794
      %v1086 = vmul.f32 %v582, %v827
      %v1087 = vmul.f32 %v582, %v797
      %v1088 = vmul.f32 %v582, %v828
      %v1089 = vmul.f32 %v582, %v800
      %v1090 = vmul.f32 %v582, %v829
      %v1091 = vmul.f32 %v582, %v803
      %v1092 = vmul.f32 %v582, %v830
      %v1093 = vadd.f32 %v1061, %v1077
      %v1094 = vadd.f32 %v1062, %v1078
      %v1095 = vadd.f32 %v1063, %v1079
      %v1096 = vadd.f32 %v1064, %v1080
      %v1097 = vadd.f32 %v1065, %v1081
      %v1098 = vadd.f32 %v1066, %v1082
      %v1099 = vadd.f32 %v1067, %v1083
      %v1100 = vadd.f32 %v1068, %v1084
      %v1101 = vadd.f32 %v1069, %v1085
      %v1102 = vadd.f32 %v1070, %v1086
      %v1103 = vadd.f32 %v1071, %v1087
      %v1104 = vadd.f32 %v1072, %v1088
      %v1105 = vadd.f32 %v1073, %v1089
      %v1106 = vadd.f32 %v1074, %v1090
      %v1107 = vadd.f32 %v1075, %v1091
      %v1108 = vadd.f32 %v1076, %v1092
      %v1109 = vmul.f32 %v618, %v878
      %v1110 = vmul.f32 %v618, %v839
      %v1111 = vmul.f32 %v618, %v879
      %v1112 = vmul.f32 %v618, %v842
      %v1113 = vmul.f32 %v618, %v880
      %v1114 = vmul.f32 %v618, %v845
      %v1115 = vmul.f32 %v618, %v881
      %v1116 = vmul.f32 %v618, %v848
      %v1117 = vmul.f32 %v618, %v882
      %v1118 = vmul.f32 %v618, %v851
      %v1119 = vmul.f32 %v618, %v883
      %v1120 = vmul.f32 %v618, %v854
      %v1121 = vmul.f32 %v618, %v884
      %v1122 = vmul.f32 %v618, %v857
      %v1123 = vmul.f32 %v618, %v350
      %v1124 = vmul.f32 %v618, %v302
      %v1125 = vadd.f32 %v1093, %v1109
      %v1126 = vadd.f32 %v1094, %v1110
      %v1127 = vadd.f32 %v1095, %v1111
      %v1128 = vadd.f32 %v1096, %v1112
      %v1129 = vadd.f32 %v1097, %v1113
      %v1130 = vadd.f32 %v1098, %v1114
      %v1131 = vadd.f32 %v1099, %v1115
      %v1132 = vadd.f32 %v1100, %v1116
      %v1133 = vadd.f32 %v1101, %v1117
      %v1134 = vadd.f32 %v1102, %v1118
      %v1135 = vadd.f32 %v1103, %v1119
      %v1136 = vadd.f32 %v1104, %v1120
      %v1137 = vadd.f32 %v1105, %v1121
      %v1138 = vadd.f32 %v1106, %v1122
      %v1139 = vadd.f32 %v1107, %v1123
      %v1140 = vadd.f32 %v1108, %v1124
      %v1141 = vmul.f32 %v654, %v745
      %v1142 = vmul.f32 %v654, %v746
      %v1143 = vmul.f32 %v654, %v747
      %v1144 = vmul.f32 %v654, %v748
      %v1145 = vmul.f32 %v654, %v749
      %v1146 = vmul.f32 %v654, %v750
      %v1147 = vmul.f32 %v654, %v751
      %v1148 = vmul.f32 %v654, %v752
      %v1149 = vmul.f32 %v654, %v753
      %v1150 = vmul.f32 %v654, %v754
      %v1151 = vmul.f32 %v654, %v755
      %v1152 = vmul.f32 %v654, %v756
      %v1153 = vmul.f32 %v654, %v757
      %v1154 = vmul.f32 %v654, %v758
      %v1155 = vmul.f32 %v654, 0.0
      %v1156 = vadd.f32 %v1125, %v1141
      %v1157 = vadd.f32 %v1126, %v1142
      %v1158 = vadd.f32 %v1127, %v1143
      %v1159 = vadd.f32 %v1128, %v1144
      %v1160 = vadd.f32 %v1129, %v1145
      %v1161 = vadd.f32 %v1130, %v1146
      %v1162 = vadd.f32 %v1131, %v1147
      %v1163 = vadd.f32 %v1132, %v1148
      %v1164 = vadd.f32 %v1133, %v1149
      %v1165 = vadd.f32 %v1134, %v1150
      %v1166 = vadd.f32 %v1135, %v1151
      %v1167 = vadd.f32 %v1136, %v1152
      %v1168 = vadd.f32 %v1137, %v1153
      %v1169 = vadd.f32 %v1138, %v1154
      %v1170 = vadd.f32 %v1139, %v1155
      %v1171 = vadd.f32 %v1140, %v1155
      %v1172 = vmul.f32 %v690, %v785
      %v1173 = vmul.f32 %v690, %v824
      %v1174 = vmul.f32 %v690, %v788
      %v1175 = vmul.f32 %v690, %v825
      %v1176 = vmul.f32 %v690, %v791
      %v1177 = vmul.f32 %v690, %v826
      %v1178 = vmul.f32 %v690, %v794
      %v1179 = vmul.f32 %v690, %v827
      %v1180 = vmul.f32 %v690, %v797
      %v1181 = vmul.f32 %v690, %v828
      %v1182 = vmul.f32 %v690, %v800
      %v1183 = vmul.f32 %v690, %v829
      %v1184 = vmul.f32 %v690, %v803
      %v1185 = vmul.f32 %v690, %v830
      %v1186 = vmul.f32 %v690, %v242
      %v1187 = vmul.f32 %v690, %v290
      %v1188 = vadd.f32 %v1156, %v1172
      %v1189 = vadd.f32 %v1157, %v1173
      %v1190 = vadd.f32 %v1158, %v1174
      %v1191 = vadd.f32 %v1159, %v1175
      %v1192 = vadd.f32 %v1160, %v1176
      %v1193 = vadd.f32 %v1161, %v1177
      %v1194 = vadd.f32 %v1162, %v1178
      %v1195 = vadd.f32 %v1163, %v1179
      %v1196 = vadd.f32 %v1164, %v1180
      %v1197 = vadd.f32 %v1165, %v1181
      %v1198 = vadd.f32 %v1166, %v1182
      %v1199 = vadd.f32 %v1167, %v1183
      %v1200 = vadd.f32 %v1168, %v1184
      %v1201 = vadd.f32 %v1169, %v1185
      %v1202 = vadd.f32 %v1170, %v1186
      %v1203 = vadd.f32 %v1171, %v1187
      %s1204 = scalar_lea.vmem %s191, 128
      %1205 = vst.msk [vmem:[%s1204] sm:$0xff] %vm723, %v1188
      %1206 = vst.msk [vmem:[%s1204 + $0x8] sm:$0xff] %vm723, %v1189
      %1207 = vst.msk [vmem:[%s1204 + $0x10] sm:$0xff] %vm723, %v1190
      %1208 = vst.msk [vmem:[%s1204 + $0x18] sm:$0xff] %vm723, %v1191
      %1209 = vst.msk [vmem:[%s1204 + $0x20] sm:$0xff] %vm723, %v1192
      %1210 = vst.msk [vmem:[%s1204 + $0x28] sm:$0xff] %vm723, %v1193
      %1211 = vst.msk [vmem:[%s1204 + $0x30] sm:$0xff] %vm723, %v1194
      %1212 = vst.msk [vmem:[%s1204 + $0x38] sm:$0xff] %vm723, %v1195
      %1213 = vst.msk [vmem:[%s1204 + $0x40] sm:$0xff] %vm723, %v1196
      %1214 = vst.msk [vmem:[%s1204 + $0x48] sm:$0xff] %vm723, %v1197
      %1215 = vst.msk [vmem:[%s1204 + $0x50] sm:$0xff] %vm723, %v1198
      %1216 = vst.msk [vmem:[%s1204 + $0x58] sm:$0xff] %vm723, %v1199
      %1217 = vst.msk [vmem:[%s1204 + $0x60] sm:$0xff] %vm723, %v1200
      %1218 = vst.msk [vmem:[%s1204 + $0x68] sm:$0xff] %vm723, %v1201
      %1219 = vst.msk [vmem:[%s1204 + $0x70] sm:$0xff] %vm723, %v1202
      %1220 = vst.msk [vmem:[%s1204 + $0x78] sm:$0xff] %vm723, %v1203
      %p1221 = scmp.lt.s32.totalorder %s17, 1
      %s1222 = scalar_select %p1221, %s17, 1
      %p1223 = scmp.lt.s32.totalorder %s18, 0
      %s1224 = scalar_select %p1223, %s18, 0
      %s1225 = smul.addr %s1222, 32
      %s1226 = sadd.s32 %s1224, %s1225
      %s1227 = smul.addr %s1226, 8
      %s1228 = scalar_lea.vmem %s2, %s1227
      // Predicated region
      $region29: #{repvggdw_forward.1} parent=27 // pred_check
        %p1229 = pneg %p99
      $region30: #{repvggdw_forward.1} parent=27 // pred_check_branch
        %1231 = sbr.rel (%p1229) target = $region32
      $region31: #{repvggdw_forward.1} parent=27 // pred_region
        _
      $region32: #{repvggdw_forward.1} parent=27 // pred_fallthru
        _
    $region28: #{repvggdw_forward.1} parent=5 // pred_fallthru
      _
    %p1232 = scmp.le.s32.totalorder 2, %s8
    // Predicated region
    $region33: #{repvggdw_forward.1} parent=5 // pred_check
      %p1233 = pneg %p1232
    $region34: #{repvggdw_forward.1} parent=5 // pred_check_branch
      %1235 = sbr.rel (%p1233) target = $region36
    $region35: #{repvggdw_forward.1} parent=5 // pred_region
      %s1236 = ssub.s32 %s8, 2
      // Predicated region
      $region37: #{repvggdw_forward.1} parent=35 // pred_check
        %p1237 = pneg %p105
      $region38: #{repvggdw_forward.1} parent=35 // pred_check_branch
        %1239 = sbr.rel (%p1237) target = $region40
      $region39: #{repvggdw_forward.1} parent=35 // pred_region
        %p1240 = scmp.lt.s32.totalorder %s19, 1
        %s1241 = scalar_select %p1240, %s19, 1
        %p1242 = scmp.lt.s32.totalorder %s20, 0
        %s1243 = scalar_select %p1242, %s20, 0
        %s1244 = smul.addr %s1241, 32
        %s1245 = sadd.s32 %s1243, %s1244
        %s1246 = smul.addr %s1245, 8
        %s1247 = scalar_lea.vmem %s2, %s1246
      $region40: #{repvggdw_forward.1} parent=35 // pred_fallthru
        _
    $region36: #{repvggdw_forward.1} parent=5 // pred_fallthru
      _
  $region6: #{repvggdw_forward.1} parent=0 // loop_footer
    %s12 = sadd.s32 1, %s8
  $region7: #{repvggdw_forward.1} parent=0 // loop_footer_branch
    %7 = sbr.rel target = $region3
  $region8: #{repvggdw_forward.1} parent=0 // loop_exit
    _

</llo_original>
